<compile_context>
chip_gen: v7x
topology: tpu7x:2x2x1
jax: 0.10.0
libtpu: 0.0.40
codegen_flags: <defaults>
</compile_context>

<pallas_src>
import numpy as np

import jax
import jax.numpy as jnp
from jax.experimental import pallas as pl
from jax.experimental.pallas import tpu as pltpu


# --------------------------------------------------------------------------------------
# PyTorch-equivalent buffer construction (done once on host).
# --------------------------------------------------------------------------------------
def make_pe_buffer(d_model: int, max_seq_len: int = 300) -> np.ndarray:
    """Reproduce the PyTorch __init__ `pe` buffer exactly (incl. the unusual cos exponent)."""
    pe = np.zeros((max_seq_len, d_model), dtype=np.float32)
    pos = np.arange(max_seq_len, dtype=np.float64)[:, None]                 # (S, 1)
    i_even = np.arange(0, d_model, 2, dtype=np.float64)[None, :]            # (1, D/2)
    pe[:, 0::2] = np.sin(pos / 10000.0 ** (2.0 * i_even / d_model)).astype(np.float32)
    pe[:, 1::2] = np.cos(pos / 10000.0 ** (2.0 * (i_even + 1.0) / d_model)).astype(np.float32)
    return pe                                                               # (max_seq_len, d_model)


# --------------------------------------------------------------------------------------
# Kernels (both are 2-D, store-dense layouts).
# --------------------------------------------------------------------------------------
def _make_lane_fold_kernel(batch: int, d_model: int, add_dtype):
    """x/o blocks: (ts, B*D); pe/w blocks: (ts, D). Requires D % 128 == 0 or B == 1."""
    def kernel(x_ref, pe_ref, w_ref, o_ref):
        ts = pe_ref.shape[0]
        gate = pe_ref[...] * jax.nn.sigmoid(w_ref[...])          # f32; sigmoid -> EUP slot
        if batch > 1:
            # Lane-aligned replication (D multiple of 128): pure vreg placement, no O(B) concat.
            gate = jnp.broadcast_to(gate[:, None, :], (ts, batch, d_model))
            gate = gate.reshape(ts, batch * d_model)
        o_ref[...] = (x_ref[...].astype(add_dtype) + gate.astype(add_dtype)).astype(o_ref.dtype)
    return kernel


def _make_row_fold_kernel(batch: int, d_model: int, add_dtype):
    """x/o blocks: (ts*B, D) on the (S*B, D) view; pe/w blocks: (ts, D)."""
    def kernel(x_ref, pe_ref, w_ref, o_ref):
        ts = pe_ref.shape[0]
        gate = pe_ref[...] * jax.nn.sigmoid(w_ref[...])
        if batch > 1:
            # Sublane (row) replication: broadcast + major-dim collapse; minor dim untouched.
            gate = jnp.broadcast_to(gate[:, None, :], (ts, batch, d_model))
            gate = gate.reshape(ts * batch, d_model)
        o_ref[...] = (x_ref[...].astype(add_dtype) + gate.astype(add_dtype)).astype(o_ref.dtype)
    return kernel


# --------------------------------------------------------------------------------------
# Tiling helpers.
# --------------------------------------------------------------------------------------
def _sublane_unit(dtype) -> int:
    """Native sublane multiple: 8 for 4-byte, 16 for 2-byte, 32 for 1-byte dtypes."""
    itemsize = jnp.dtype(dtype).itemsize
    return max(8, 32 // max(int(itemsize), 1))


def _physical_vmem_bytes() -> int:
    try:
        return int(pltpu.get_tpu_info().vmem_capacity_bytes)
    except Exception:
        return 64 << 20          # conservative (v7x per-TC VMEM)


def _is_v5e() -> bool:
    try:
        kind = jax.devices()[0].device_kind.lower()
        return ("v5 lite" in kind) or ("v5e" in kind) or ("v5litepod" in kind)
    except Exception:
        return False


def _choose_block_rows(total_rows: int, row_bytes: int, sublane: int,
                       target_block_bytes: int) -> int:
    """Sequence rows per tile: dtype-native sublane multiple, ~target-sized x block,
    snapped so the tail tile is either empty or at least half a tile."""
    rows = max(sublane, int(target_block_bytes) // max(int(row_bytes), 1))
    rows = max(sublane, (rows // sublane) * sublane)
    if rows >= total_rows:
        return int(total_rows)
    t = int(rows)
    while t >= max(sublane, rows // 2):
        rem = total_rows % t
        if rem == 0 or rem >= t // 2:
            return int(t)
        t -= sublane
    return int(rows)


# --------------------------------------------------------------------------------------
# Wrapper.
# --------------------------------------------------------------------------------------
def position_encoder_forward(x: jax.Array, pe: jax.Array, pos_emb_weight: jax.Array,
                             *, block_rows: int | None = None) -> jax.Array:
    """x: (seq_len, batch, d_model). pe / pos_emb_weight: (max_seq_len, d_model)."""
    S, B, D = x.shape
    pe_s = pe[:S].astype(jnp.float32)              # (S, D)
    w_s = pos_emb_weight[:S].astype(jnp.float32)   # (S, D)

    itemsize = jnp.dtype(x.dtype).itemsize
    sublane = _sublane_unit(x.dtype)

    # Generation-aware VMEM budget.
    vmem_cap = _physical_vmem_bytes()
    if vmem_cap >= (100 << 20):                    # v5e / v6e: 128 MiB physical VMEM
        target_blk, limit_cap = 14 << 20, 96 << 20
    else:                                          # v7x: 64 MiB per TensorCore
        target_blk, limit_cap = 10 << 20, 56 << 20

    row_bytes = B * D * itemsize                   # bytes of x per sequence row
    if block_rows is None:
        ts = _choose_block_rows(S, row_bytes, sublane, target_blk)
    else:
        ts = min(int(block_rows), S)
        if ts < S:
            ts = max(sublane, (ts // sublane) * sublane)

    # Double-buffered working set (x in + out + pe + w) must fit under the limit cap.
    def _required(ts_):
        x_blk = ts_ * row_bytes
        pe_blk = ts_ * D * 4
        return 2 * (2 * x_blk + 2 * pe_blk) + (4 << 20)

    while ts > sublane and _required(ts) > limit_cap:
        ts = max(sublane, ((ts // 2) // sublane) * sublane)
    # TODO(synk): if even a `sublane`-row block exceeds the budget (extreme B*D), add a second
    # grid axis over lane chunks of B*D instead of relying purely on vmem_limit.

    vmem_limit = int(min(max(_required(ts), 32 << 20), limit_cap))
    grid = (pl.cdiv(S, ts),)

    compiler_params = pltpu.CompilerParams(
        dimension_semantics=("parallel",),         # shard the S grid across TCs on v7x
        vmem_limit_bytes=vmem_limit,
    )

    # bf16 activations stay bf16 through the add on chips with a bf16 VPU (v6e/v7x);
    # the gate itself is always computed in f32.
    if x.dtype == jnp.bfloat16 and not _is_v5e():
        add_dtype = jnp.bfloat16
    else:
        add_dtype = jnp.float32

    if (B == 1) or (D % 128 == 0):
        # Lane-fold: batch folded into lanes -> full (8,128) occupancy, unmasked stores.
        BD = B * D
        out2 = pl.pallas_call(
            _make_lane_fold_kernel(B, D, add_dtype),
            out_shape=jax.ShapeDtypeStruct((S, BD), x.dtype),
            grid=grid,
            in_specs=[
                pl.BlockSpec((ts, BD), lambda i: (i, 0)),
                pl.BlockSpec((ts, D), lambda i: (i, 0)),
                pl.BlockSpec((ts, D), lambda i: (i, 0)),
            ],
            out_specs=pl.BlockSpec((ts, BD), lambda i: (i, 0)),
            compiler_params=compiler_params,
        )(x.reshape(S, BD), pe_s, w_s)
        return out2.reshape(S, B, D)

    # Row-fold: batch folded into sublanes (x viewed as (S*B, D)) -> sublane-dense blocks;
    # replaces the old (ts, B, D) fallback that under-filled vregs and used masked stores.
    out2 = pl.pallas_call(
        _make_row_fold_kernel(B, D, add_dtype),
        out_shape=jax.ShapeDtypeStruct((S * B, D), x.dtype),
        grid=grid,
        in_specs=[
            pl.BlockSpec((ts * B, D), lambda i: (i, 0)),
            pl.BlockSpec((ts, D), lambda i: (i, 0)),
            pl.BlockSpec((ts, D), lambda i: (i, 0)),
        ],
        out_specs=pl.BlockSpec((ts * B, D), lambda i: (i, 0)),
        compiler_params=compiler_params,
    )(x.reshape(S * B, D), pe_s, w_s)
    return out2.reshape(S, B, D)


# --------------------------------------------------------------------------------------
# Self-test.
# --------------------------------------------------------------------------------------
if __name__ == "__main__":
    MAX_SEQ_LEN = 300
    key = jax.random.PRNGKey(0)

    def run_case(seq_len, batch, d_model, block_rows, key, dtype=jnp.float32, tol=1e-5):
        pe = jnp.asarray(make_pe_buffer(d_model, MAX_SEQ_LEN))                      # buffer 'pe'
        key, k1, k2 = jax.random.split(key, 3)
        # Parameter starts as ones (module init); perturb so the sigmoid gate is non-trivial.
        w = jnp.ones((MAX_SEQ_LEN, d_model), jnp.float32) + 0.1 * jax.random.normal(
            k1, (MAX_SEQ_LEN, d_model), dtype=jnp.float32)
        x = jax.random.normal(k2, (seq_len, batch, d_model), dtype=jnp.float32).astype(dtype)

        # Reference in plain JAX (mirrors the PyTorch permute / add / permute).
        gate = pe[:seq_len] * jax.nn.sigmoid(w[:seq_len])
        ref = jnp.transpose(
            jnp.transpose(x.astype(jnp.float32), (1, 0, 2)) + gate[None], (1, 0, 2))

        out = position_encoder_forward(x, pe, w, block_rows=block_rows)
        out = jax.block_until_ready(out)
        assert out.shape == (seq_len, batch, d_model)
        assert out.dtype == x.dtype
        assert jnp.allclose(out.astype(jnp.float32), ref, atol=tol, rtol=tol), \
            (seq_len, batch, d_model, str(dtype))
        return key

    # Row-fold path (D % 128 != 0), single block.
    key = run_case(seq_len=8, batch=2, d_model=32, block_rows=None, key=key)
    # Row-fold, multi-block with a partial edge tile (300 not a multiple of 64).
    key = run_case(seq_len=300, batch=2, d_model=32, block_rows=64, key=key)
    # Lane-fold path (D % 128 == 0), multi-block + partial edge tile.
    key = run_case(seq_len=300, batch=2, d_model=128, block_rows=64, key=key)
    # Lane-fold with batch == 1.
    key = run_case(seq_len=64, batch=1, d_model=32, block_rows=16, key=key)
    # bf16 activations: exercises dtype-aware sublane rounding (24 -> 16) and bf16 add path.
    key = run_case(seq_len=64, batch=2, d_model=128, block_rows=24, key=key,
                   dtype=jnp.bfloat16, tol=5e-2)

    print("KERNEL_OK")
</pallas_src>

<mosaic_0001>
module attributes {stable_mosaic.version = 11 : i64} {
  func.func @kernel(%arg0: i32, %arg1: memref<16x32xf32, #tpu.memory_space<vmem>>, %arg2: memref<8x32xf32, #tpu.memory_space<vmem>>, %arg3: memref<8x32xf32, #tpu.memory_space<vmem>>, %arg4: memref<16x32xf32, #tpu.memory_space<vmem>>) attributes {dimension_semantics = [#tpu.dimension_semantics<parallel>], iteration_bounds = array<i64: 1>, scalar_prefetch = 0 : i64, scratch_operands = 0 : i64, tpu.core_type = #tpu.core_type<tc>, window_params = [{transform_indices = @transform_0, window_bounds = array<i64: 16, 32>}, {transform_indices = @transform_1, window_bounds = array<i64: 8, 32>}, {transform_indices = @transform_2, window_bounds = array<i64: 8, 32>}, {transform_indices = @transform_3, window_bounds = array<i64: 16, 32>}]} {
    %c0 = arith.constant 0 : index
    %c0_0 = arith.constant 0 : index
    %0 = vector.load %arg2[%c0, %c0_0] : memref<8x32xf32, #tpu.memory_space<vmem>>, vector<8x32xf32>
    %c0_1 = arith.constant 0 : index
    %c0_2 = arith.constant 0 : index
    %1 = vector.load %arg3[%c0_1, %c0_2] : memref<8x32xf32, #tpu.memory_space<vmem>>, vector<8x32xf32>
    %2 = arith.negf %1 : vector<8x32xf32>
    %3 = math.exp %2 : vector<8x32xf32>
    %cst = arith.constant 1.000000e+00 : f32
    %4 = vector.broadcast %cst : f32 to vector<8x32xf32>
    %5 = arith.addf %4, %3 : vector<8x32xf32>
    %6 = arith.divf %4, %5 : vector<8x32xf32>
    %7 = arith.mulf %0, %6 : vector<8x32xf32>
    %8 = vector.shape_cast %7 : vector<8x32xf32> to vector<8x1x32xf32>
    %9 = vector.shape_cast %8 : vector<8x1x32xf32> to vector<8x1x32xf32>
    %10 = vector.broadcast %9 : vector<8x1x32xf32> to vector<8x2x32xf32>
    %11 = vector.shape_cast %10 : vector<8x2x32xf32> to vector<16x32xf32>
    %c0_3 = arith.constant 0 : index
    %c0_4 = arith.constant 0 : index
    %12 = vector.load %arg1[%c0_3, %c0_4] : memref<16x32xf32, #tpu.memory_space<vmem>>, vector<16x32xf32>
    %13 = arith.addf %12, %11 : vector<16x32xf32>
    %c0_5 = arith.constant 0 : index
    %c0_6 = arith.constant 0 : index
    %14 = vector.load %arg4[%c0_5, %c0_6] : memref<16x32xf32, #tpu.memory_space<vmem>>, vector<16x32xf32>
    tpu.vector_store %arg4[%c0_5, %c0_6], %13 {strides = array<i32>} : memref<16x32xf32, #tpu.memory_space<vmem>>, vector<16x32xf32>,
    return
  }
  func.func @transform_0(%arg0: i32) -> (i32, i32) {
    %c0_i32 = arith.constant 0 : i32
    %c0_i32_0 = arith.constant 0 : i32
    return %arg0, %c0_i32 : i32, i32
  }
  func.func @transform_1(%arg0: i32) -> (i32, i32) {
    %c0_i32 = arith.constant 0 : i32
    %c0_i32_0 = arith.constant 0 : i32
    return %arg0, %c0_i32 : i32, i32
  }
  func.func @transform_2(%arg0: i32) -> (i32, i32) {
    %c0_i32 = arith.constant 0 : i32
    %c0_i32_0 = arith.constant 0 : i32
    return %arg0, %c0_i32 : i32, i32
  }
  func.func @transform_3(%arg0: i32) -> (i32, i32) {
    %c0_i32 = arith.constant 0 : i32
    %c0_i32_0 = arith.constant 0 : i32
    return %arg0, %c0_i32 : i32, i32
  }
}

</mosaic_0001>

<llo_original>
// kernel: tpu_custom_call.1
$region0: #{tpu_custom_call.1}
  #allocation0 [shape = 'u32[]', space=smem, size = 0x4, offset = 0x4, fixed_abs, tag = 'smem constant byte address 0x4 - core index']
  #allocation1 [shape = 'u32[144,128]{1,0:T(1,128)}', space=vmem, size = 0x12000, scoped, tag = 'internal scratch']
  %s0 = inlined_call_operand.hbm [shape: f32[16,32], index: 0, kind: input, shape index: {}]
  %s1 = inlined_call_operand.hbm [shape: f32[8,32], index: 1, kind: input, shape index: {}]
  %s2 = inlined_call_operand.hbm [shape: f32[8,32], index: 2, kind: input, shape index: {}]
  %s3 = inlined_call_operand.hbm [shape: f32[16,32], index: 3, kind: output, shape index: {}]
  %s4 = sld [smem:[#allocation0]]
  $region34: #{tpu_custom_call.1} parent=0
    _
  %s6 = ssub.s32 1, %s4
  %s7 = scalar_select 0, %s6, %s4
  $region1: #{tpu_custom_call.1} parent=0
    #allocation2 [shape = 'u8[8192]{0}', space=vmem, size = 0x2000, scoped, tag = 'input window, operand 0, single buffered']
    #allocation3 [shape = 's32[1]{0}', space=sflag, size = 0x4, scoped, tag = 'scoped memory for tpu_custom_call.1']
    #allocation4 [shape = 's32[1]{0}', space=sflag, size = 0x4, scoped, tag = 'scoped memory for tpu_custom_call.1']
    #allocation5 [shape = 'u8[4096]{0}', space=vmem, size = 0x1000, scoped, tag = 'input window, operand 1, single buffered']
    #allocation6 [shape = 's32[1]{0}', space=sflag, size = 0x4, scoped, tag = 'scoped memory for tpu_custom_call.1']
    #allocation7 [shape = 'u8[4096]{0}', space=vmem, size = 0x1000, scoped, tag = 'input window, operand 2, single buffered']
    #allocation8 [shape = 'u8[8192]{0}', space=vmem, size = 0x2000, scoped, tag = 'output window, operand 0, single buffered']
    %8 = vsyncpa [#allocation3], 0
    %9 = vsyncpa [#allocation6], 0
    %10 = vsyncpa [#allocation4], 0
    // Predicated region
    $region2: #{tpu_custom_call.1} parent=1 // pred_check
      _
    $region3: #{tpu_custom_call.1} parent=1 // pred_check_branch
      %12 = sbr.rel (0) target = $region5
    $region4: #{tpu_custom_call.1} parent=1 // pred_region
      %s14 = ssub.s32 256, 256
      %15 = vsyncadd [#allocation3], %s14
      %s16 = sshll.u32 [#allocation2], 4
      %s17 = int_to_ptr.vmem [resolvable:$true] %s16
      %22 = dma.hbm_to_vmem [thread:$0]  %s0, 256, %s17, [#allocation3], 128, 128, 8
    $region5: #{tpu_custom_call.1} parent=1 // pred_fallthru
      _
    // Predicated region
    $region6: #{tpu_custom_call.1} parent=1 // pred_check
      _
    $region7: #{tpu_custom_call.1} parent=1 // pred_check_branch
      %24 = sbr.rel (0) target = $region9
    $region8: #{tpu_custom_call.1} parent=1 // pred_region
      %s26 = ssub.s32 128, 128
      %27 = vsyncadd [#allocation6], %s26
      %s29 = sshll.u32 [#allocation5], 4
      %s30 = int_to_ptr.vmem [resolvable:$true] %s29
      %32 = dma.hbm_to_vmem [thread:$0]  %s1, 128, %s30, [#allocation6]
    $region9: #{tpu_custom_call.1} parent=1 // pred_fallthru
      _
    // Predicated region
    $region10: #{tpu_custom_call.1} parent=1 // pred_check
      _
    $region11: #{tpu_custom_call.1} parent=1 // pred_check_branch
      %34 = sbr.rel (0) target = $region13
    $region12: #{tpu_custom_call.1} parent=1 // pred_region
      %s36 = ssub.s32 128, 128
      %37 = vsyncadd [#allocation6], %s36
      %s39 = sshll.u32 [#allocation7], 4
      %s40 = int_to_ptr.vmem [resolvable:$true] %s39
      %42 = dma.hbm_to_vmem [thread:$0]  %s2, 128, %s40, [#allocation6]
    $region13: #{tpu_custom_call.1} parent=1 // pred_fallthru
      _
    // Predicated region
    $region14: #{tpu_custom_call.1} parent=1 // pred_check
      _
    $region15: #{tpu_custom_call.1} parent=1 // pred_check_branch
      %44 = sbr.rel (0) target = $region17
    $region16: #{tpu_custom_call.1} parent=1 // pred_region
      %45 = dma.done [#allocation3], 256
    $region17: #{tpu_custom_call.1} parent=1 // pred_fallthru
      _
    // Predicated region
    $region18: #{tpu_custom_call.1} parent=1 // pred_check
      _
    $region19: #{tpu_custom_call.1} parent=1 // pred_check_branch
      %47 = sbr.rel (0) target = $region21
    $region20: #{tpu_custom_call.1} parent=1 // pred_region
      %48 = dma.done [#allocation6], 128
    $region21: #{tpu_custom_call.1} parent=1 // pred_fallthru
      _
    // Predicated region
    $region22: #{tpu_custom_call.1} parent=1 // pred_check
      _
    $region23: #{tpu_custom_call.1} parent=1 // pred_check_branch
      %50 = sbr.rel (0) target = $region25
    $region24: #{tpu_custom_call.1} parent=1 // pred_region
      %51 = dma.done [#allocation6], 128
    $region25: #{tpu_custom_call.1} parent=1 // pred_fallthru
      _
    %v52 = vld [vmem:[#allocation5] sm:$0xff]
    %v53 = vld [vmem:[#allocation7] sm:$0xff]
    %v54 = vxor.u32 %v53, 2147483648
    %v55 = vmul.f32 %v54, 1.442695
    %v56 = vpow.pop %v55
    %v57 = vadd.f32 %v56, 1.0
    %v58 = vrcp.pop %v57
    %v59 = vmul.f32 1.0, %v58
    %v60 = vmul.f32 %v52, %v59
    %v62 = vcombine.high %v60, %v60
    %v64 = vunpack.c.l.s4 1966171168
    %v65 = vunpack.c.0.s8 %v64
    %v66 = vlaneseq
    %v67 = vshrl.u32 %v66, 7
    %v68 = vsub.s32 %v65, %v67
    %v69 = vrot.slane %v60, %v68
    %v71 = vunpack.c.l.s4 1966171168
    %v72 = vunpack.c.0.s8 %v71
    %v73 = vlaneseq
    %v74 = vshrl.u32 %v73, 7
    %v75 = vsub.s32 %v72, %v74
    %v76 = vrot.slane %v62, %v75
    %v77 = vcombine.high %v69, %v69
    %v78 = vcombine.high %v76, %v76
    %v80 = vunpack.c.l.s4 1966171168
    %v81 = vunpack.c.0.s8 %v80
    %v82 = vlaneseq
    %v83 = vshrl.u32 %v82, 7
    %v84 = vsub.s32 %v81, %v83
    %v85 = vrot.slane %v69, %v84
    %v87 = vunpack.c.l.s4 1966171168
    %v88 = vunpack.c.0.s8 %v87
    %v89 = vlaneseq
    %v90 = vshrl.u32 %v89, 7
    %v91 = vsub.s32 %v88, %v90
    %v92 = vrot.slane %v76, %v91
    %v94 = vunpack.c.l.s4 1966171168
    %v95 = vunpack.c.0.s8 %v94
    %v96 = vlaneseq
    %v97 = vshrl.u32 %v96, 7
    %v98 = vsub.s32 %v95, %v97
    %v99 = vrot.slane %v77, %v98
    %v101 = vunpack.c.l.s4 1966171168
    %v102 = vunpack.c.0.s8 %v101
    %v103 = vlaneseq
    %v104 = vshrl.u32 %v103, 7
    %v105 = vsub.s32 %v102, %v104
    %v106 = vrot.slane %v78, %v105
    %v107 = vcombine.high %v85, %v85
    %v108 = vcombine.high %v92, %v92
    %v109 = vcombine.high %v99, %v99
    %v110 = vcombine.high %v106, %v106
    %v111 = vlaneseq
    %v112 = vshrl.u32 %v111, 7
    %v113 = vsub.s32 0, %v112
    %v114 = vrot.slane %v85, %v113
    %v115 = vlaneseq
    %v116 = vshrl.u32 %v115, 7
    %v117 = vsub.s32 0, %v116
    %v118 = vrot.slane %v99, %v117
    %v119 = vlaneseq
    %v120 = vshrl.u32 %v119, 7
    %v121 = vsub.s32 0, %v120
    %v122 = vrot.slane %v107, %v121
    %v123 = vlaneseq
    %v124 = vshrl.u32 %v123, 7
    %v125 = vsub.s32 0, %v124
    %v126 = vrot.slane %v109, %v125
    %v127 = vlaneseq
    %v128 = vshrl.u32 %v127, 7
    %v129 = vsub.s32 0, %v128
    %v130 = vrot.slane %v92, %v129
    %v131 = vlaneseq
    %v132 = vshrl.u32 %v131, 7
    %v133 = vsub.s32 0, %v132
    %v134 = vrot.slane %v106, %v133
    %v135 = vlaneseq
    %v136 = vshrl.u32 %v135, 7
    %v137 = vsub.s32 0, %v136
    %v138 = vrot.slane %v108, %v137
    %v139 = vlaneseq
    %v140 = vshrl.u32 %v139, 7
    %v141 = vsub.s32 0, %v140
    %v142 = vrot.slane %v110, %v141
    %v143 = vld [vmem:[#allocation2] sm:$0xff]
    %v144 = vld [vmem:[#allocation2 + $0x8] sm:$0xff]
    %v145 = vcombine.low %v114, %v118
    %v146 = vcombine.low %v122, %v126
    %v148 = vunpack.c.l.s4 1983009808
    %v149 = vunpack.c.0.s8 %v148
    %v150 = vlaneseq
    %v151 = vshrl.u32 %v150, 7
    %v152 = vsub.s32 %v149, %v151
    %v153 = vrot.slane %v145, %v152
    %v155 = vunpack.c.l.s4 1983009808
    %v156 = vunpack.c.0.s8 %v155
    %v157 = vlaneseq
    %v158 = vshrl.u32 %v157, 7
    %v159 = vsub.s32 %v156, %v158
    %v160 = vrot.slane %v146, %v159
    %v161 = vcombine.low %v153, %v160
    %v162 = vcombine.low %v130, %v134
    %v163 = vcombine.low %v138, %v142
    %v165 = vunpack.c.l.s4 1983009808
    %v166 = vunpack.c.0.s8 %v165
    %v167 = vlaneseq
    %v168 = vshrl.u32 %v167, 7
    %v169 = vsub.s32 %v166, %v168
    %v170 = vrot.slane %v162, %v169
    %v172 = vunpack.c.l.s4 1983009808
    %v173 = vunpack.c.0.s8 %v172
    %v174 = vlaneseq
    %v175 = vshrl.u32 %v174, 7
    %v176 = vsub.s32 %v173, %v175
    %v177 = vrot.slane %v163, %v176
    %v178 = vcombine.low %v170, %v177
    %v181 = vadd.f32 %v143, %v161
    %v182 = vadd.f32 %v144, %v178
    %vm183 = vcmask 261120
    %184 = vst.msk [vmem:[#allocation8] sm:$0xff] %vm183, %v181
    %185 = vst.msk [vmem:[#allocation8 + $0x8] sm:$0xff] %vm183, %v182
    // Predicated region
    $region26: #{tpu_custom_call.1} parent=1 // pred_check
      _
    $region27: #{tpu_custom_call.1} parent=1 // pred_check_branch
      %187 = sbr.rel (0) target = $region29
    $region28: #{tpu_custom_call.1} parent=1 // pred_region
      %s189 = ssub.s32 256, 256
      %190 = vsyncadd [#allocation4], %s189
      %s191 = sshll.u32 [#allocation8], 4
      %s192 = int_to_ptr.vmem [resolvable:$true] %s191
      %197 = dma.vmem_to_hbm [thread:$0]  %s192, 256, %s3, [#allocation4], 128, 128, 8
    $region29: #{tpu_custom_call.1} parent=1 // pred_fallthru
      _
    // Predicated region
    $region30: #{tpu_custom_call.1} parent=1 // pred_check
      _
    $region31: #{tpu_custom_call.1} parent=1 // pred_check_branch
      %199 = sbr.rel (0) target = $region33
    $region32: #{tpu_custom_call.1} parent=1 // pred_region
      %200 = dma.done [#allocation4], 256
    $region33: #{tpu_custom_call.1} parent=1 // pred_fallthru
      _
    %201 = vsyncpa [#allocation3], 1
    %202 = vsyncpa [#allocation6], 1
    %203 = vsyncpa [#allocation4], 1

</llo_original>
